<compile_context>
chip_gen: v6e
topology: v6e:2x2x1
jax: 0.10.0
libtpu: 0.0.40
codegen_flags: <defaults>
</compile_context>

<pallas_src>
import jax
import jax.numpy as jnp
from jax import lax
from jax.experimental import pallas as pl
from jax.experimental.pallas import tpu as pltpu


def _round_up(x, m):
    return pl.cdiv(x, m) * m


def _dqn_kernel(x_ref, w1_ref, b1_ref, w2_ref, b2_ref, w3_ref, b3_ref, o_ref):
    """Fused 3-layer MLP.

    x_ref : (tb, d_in)  input batch tile, natural (batch, features) layout
    w1_ref: (fc1, d_in) PyTorch (out, in) layout
    b1_ref: (fc1, 1)
    w2_ref: (fc2, fc1)
    b2_ref: (fc2, 1)
    w3_ref: (fc2, 1)    fc3 weight stored as a column
    b3_ref: (1, 1)
    o_ref : (1, tb)     lane-dense Q-value tile (batch on the lane axis)
    """
    x = x_ref[...]                                          # (tb, d_in)

    # fc1: contract over d_in; result is (fc1, tb) -> batch lands on lanes.
    h1 = lax.dot_general(
        w1_ref[...], x,
        dimension_numbers=(((1,), (1,)), ((), ())),
        preferred_element_type=jnp.float32)
    h1 = jnp.maximum(h1 + b1_ref[...], 0.0)                 # (fc1, tb)

    # fc2: standard MXU matmul, stays feature-major.
    h2 = jnp.dot(w2_ref[...], h1, preferred_element_type=jnp.float32)
    h2 = jnp.maximum(h2 + b2_ref[...], 0.0)                 # (fc2, tb)

    # fc3 has one output unit: VPU multiply + sublane (XLU) reduction instead
    # of a wasteful (fc2 x 1) MXU matmul; result is already lane-dense.
    q = jnp.sum(h2 * w3_ref[...], axis=0, keepdims=True) + b3_ref[...]   # (1, tb)
    o_ref[...] = q.astype(o_ref.dtype)


def _choose_tb(batch, block_batch):
    """Pick a batch tile (lane width of the output tile)."""
    tb_max = _round_up(block_batch, 128)
    if batch <= tb_max:
        if batch >= 256:
            # Split into two lane-aligned tiles so the 'parallel' batch axis
            # actually shards across both TensorCores on v7x.
            half = _round_up(pl.cdiv(batch, 2), 128)
            if half < batch:
                return half
        # Single full-batch tile: block dims equal the full array dims, so the
        # (8, 128) layout constraint is trivially satisfied for any batch size.
        return batch
    return tb_max


def dqn_forward(state_action, params, *, block_batch=2048):
    """Fused DQN forward.  state_action: (B, d_in) f32.  Returns (B, 1) f32."""
    x = state_action.astype(jnp.float32)        # no-op if already f32
    B, d_in = x.shape

    w1 = jnp.asarray(params["w1"], jnp.float32)              # (fc1, d_in)
    w2 = jnp.asarray(params["w2"], jnp.float32)              # (fc2, fc1)
    fc1, fc2 = w1.shape[0], w2.shape[0]
    b1 = jnp.asarray(params["b1"], jnp.float32).reshape(fc1, 1)
    b2 = jnp.asarray(params["b2"], jnp.float32).reshape(fc2, 1)
    w3 = jnp.asarray(params["w3"], jnp.float32).reshape(fc2, 1)  # (1,fc2) -> column
    b3 = jnp.asarray(params["b3"], jnp.float32).reshape(1, 1)

    tb = _choose_tb(B, block_batch)
    num_tiles = pl.cdiv(B, tb)

    out = pl.pallas_call(
        _dqn_kernel,
        out_shape=jax.ShapeDtypeStruct((1, B), jnp.float32),
        grid=(num_tiles,),
        in_specs=[
            pl.BlockSpec((tb, d_in), lambda i: (i, 0)),    # x batch tile
            pl.BlockSpec((fc1, d_in), lambda i: (0, 0)),   # w1  (VMEM-resident)
            pl.BlockSpec((fc1, 1), lambda i: (0, 0)),      # b1
            pl.BlockSpec((fc2, fc1), lambda i: (0, 0)),    # w2
            pl.BlockSpec((fc2, 1), lambda i: (0, 0)),      # b2
            pl.BlockSpec((fc2, 1), lambda i: (0, 0)),      # w3
            pl.BlockSpec((1, 1), lambda i: (0, 0)),        # b3
        ],
        out_specs=pl.BlockSpec((1, tb), lambda i: (0, i)),  # lane-dense q tile
        compiler_params=pltpu.CompilerParams(
            dimension_semantics=("parallel",)),
    )(x, w1, b1, w2, b2, w3, b3)

    return out.reshape(B, 1)


def init_params(key, in_dim, fc1_dims, fc2_dims):
    """nn.Linear-style init U(-1/sqrt(fan_in), +1/sqrt(fan_in)), PyTorch (out,in) layout."""
    ks = jax.random.split(key, 6)

    def linear(kw, kb, fan_in, fan_out):
        bound = 1.0 / float(fan_in) ** 0.5
        w = jax.random.uniform(kw, (fan_out, fan_in), jnp.float32, -bound, bound)
        b = jax.random.uniform(kb, (fan_out,), jnp.float32, -bound, bound)
        return w, b

    w1, b1 = linear(ks[0], ks[1], in_dim, fc1_dims)
    w2, b2 = linear(ks[2], ks[3], fc1_dims, fc2_dims)
    w3, b3 = linear(ks[4], ks[5], fc2_dims, 1)   # module forces 1 output unit
    return dict(w1=w1, b1=b1, w2=w2, b2=b2, w3=w3, b3=b3)


def reference_forward(state_action, p):
    """Plain-JAX reference matching the PyTorch forward semantics."""
    h1 = jnp.maximum(state_action @ p["w1"].T + p["b1"], 0.0)
    h2 = jnp.maximum(h1 @ p["w2"].T + p["b2"], 0.0)
    return h2 @ p["w3"].T + p["b3"]


if __name__ == "__main__":
    # Shapes consistent with the module:
    #   input_dims = [12], n_actions = 4  ->  kernel input dim = 16
    #   fc1_dims = 32, fc2_dims = 32, output dim = 1
    batch = 8
    obs_dim, n_actions = 12, 4
    in_dim = obs_dim + n_actions
    fc1_dims, fc2_dims = 32, 32

    key = jax.random.PRNGKey(0)
    k_x, k_p = jax.random.split(key)

    state_action = jax.random.normal(k_x, (batch, in_dim), jnp.float32)
    params = init_params(k_p, in_dim, fc1_dims, fc2_dims)

    q = dqn_forward(state_action, params)
    q = jax.block_until_ready(q)

    q_ref = reference_forward(state_action, params)
    assert q.shape == (batch, 1)
    assert jnp.allclose(q, q_ref, atol=1e-4, rtol=1e-4)

    print("KERNEL_OK")
</pallas_src>

<mosaic_0001>
module attributes {stable_mosaic.version = 11 : i64} {
  func.func @_dqn_kernel(%arg0: i32, %arg1: memref<8x16xf32, #tpu.memory_space<vmem>>, %arg2: memref<32x16xf32, #tpu.memory_space<vmem>>, %arg3: memref<32x1xf32, #tpu.memory_space<vmem>>, %arg4: memref<32x32xf32, #tpu.memory_space<vmem>>, %arg5: memref<32x1xf32, #tpu.memory_space<vmem>>, %arg6: memref<32x1xf32, #tpu.memory_space<vmem>>, %arg7: memref<1x1xf32, #tpu.memory_space<vmem>>, %arg8: memref<1x8xf32, #tpu.memory_space<vmem>>) attributes {dimension_semantics = [#tpu.dimension_semantics<parallel>], iteration_bounds = array<i64: 1>, scalar_prefetch = 0 : i64, scratch_operands = 0 : i64, tpu.core_type = #tpu.core_type<tc>, window_params = [{transform_indices = @transform_0, window_bounds = array<i64: 8, 16>}, {pipeline_mode = #tpu.pipeline_mode<synchronous>, transform_indices = @transform_1, window_bounds = array<i64: 32, 16>}, {pipeline_mode = #tpu.pipeline_mode<synchronous>, transform_indices = @transform_2, window_bounds = array<i64: 32, 1>}, {pipeline_mode = #tpu.pipeline_mode<synchronous>, transform_indices = @transform_3, window_bounds = array<i64: 32, 32>}, {pipeline_mode = #tpu.pipeline_mode<synchronous>, transform_indices = @transform_4, window_bounds = array<i64: 32, 1>}, {pipeline_mode = #tpu.pipeline_mode<synchronous>, transform_indices = @transform_5, window_bounds = array<i64: 32, 1>}, {pipeline_mode = #tpu.pipeline_mode<synchronous>, transform_indices = @transform_6, window_bounds = array<i64: 1, 1>}, {transform_indices = @transform_7, window_bounds = array<i64: 1, 8>}]} {
    %c0 = arith.constant 0 : index
    %c0_0 = arith.constant 0 : index
    %0 = vector.load %arg1[%c0, %c0_0] : memref<8x16xf32, #tpu.memory_space<vmem>>, vector<8x16xf32>
    %c0_1 = arith.constant 0 : index
    %c0_2 = arith.constant 0 : index
    %1 = vector.load %arg2[%c0_1, %c0_2] : memref<32x16xf32, #tpu.memory_space<vmem>>, vector<32x16xf32>
    %cst = arith.constant dense<0.000000e+00> : vector<32x8xf32>
    %2 = tpu.matmul %1, %0, %cst {dimension_numbers = #tpu.dot_dimension_numbers<[1], [1], [0], [0], [0, 0, 1, 0], [], []>} : vector<32x16xf32>, vector<8x16xf32>, vector<32x8xf32> -> vector<32x8xf32>
    %c0_3 = arith.constant 0 : index
    %c0_4 = arith.constant 0 : index
    %3 = vector.load %arg3[%c0_3, %c0_4] : memref<32x1xf32, #tpu.memory_space<vmem>>, vector<32x1xf32>
    %4 = vector.broadcast %3 : vector<32x1xf32> to vector<32x8xf32>
    %5 = arith.addf %2, %4 : vector<32x8xf32>
    %cst_5 = arith.constant 0.000000e+00 : f32
    %6 = vector.broadcast %cst_5 : f32 to vector<32x8xf32>
    %7 = arith.maximumf %5, %6 : vector<32x8xf32>
    %c0_6 = arith.constant 0 : index
    %c0_7 = arith.constant 0 : index
    %8 = vector.load %arg4[%c0_6, %c0_7] : memref<32x32xf32, #tpu.memory_space<vmem>>, vector<32x32xf32>
    %cst_8 = arith.constant dense<0.000000e+00> : vector<32x8xf32>
    %9 = tpu.matmul %8, %7, %cst_8 {dimension_numbers = #tpu.dot_dimension_numbers<[1], [0], [0], [1], [0, 0, 1, 1], [], []>} : vector<32x32xf32>, vector<32x8xf32>, vector<32x8xf32> -> vector<32x8xf32>
    %c0_9 = arith.constant 0 : index
    %c0_10 = arith.constant 0 : index
    %10 = vector.load %arg5[%c0_9, %c0_10] : memref<32x1xf32, #tpu.memory_space<vmem>>, vector<32x1xf32>
    %11 = vector.broadcast %10 : vector<32x1xf32> to vector<32x8xf32>
    %12 = arith.addf %9, %11 : vector<32x8xf32>
    %cst_11 = arith.constant 0.000000e+00 : f32
    %13 = vector.broadcast %cst_11 : f32 to vector<32x8xf32>
    %14 = arith.maximumf %12, %13 : vector<32x8xf32>
    %c0_12 = arith.constant 0 : index
    %c0_13 = arith.constant 0 : index
    %15 = vector.load %arg6[%c0_12, %c0_13] : memref<32x1xf32, #tpu.memory_space<vmem>>, vector<32x1xf32>
    %16 = vector.broadcast %15 : vector<32x1xf32> to vector<32x8xf32>
    %17 = arith.mulf %14, %16 : vector<32x8xf32>
    %cst_14 = arith.constant dense<0.000000e+00> : vector<8xf32>
    %18 = vector.multi_reduction <add>, %17, %cst_14 [0] : vector<32x8xf32> to vector<8xf32>
    %19 = vector.shape_cast %18 : vector<8xf32> to vector<1x8xf32>
    %c0_15 = arith.constant 0 : index
    %c0_16 = arith.constant 0 : index
    %20 = vector.load %arg7[%c0_15, %c0_16] : memref<1x1xf32, #tpu.memory_space<vmem>>, vector<1x1xf32>
    %21 = vector.broadcast %20 : vector<1x1xf32> to vector<1x8xf32>
    %22 = arith.addf %19, %21 : vector<1x8xf32>
    %c0_17 = arith.constant 0 : index
    %c0_18 = arith.constant 0 : index
    %23 = vector.load %arg8[%c0_17, %c0_18] : memref<1x8xf32, #tpu.memory_space<vmem>>, vector<1x8xf32>
    tpu.vector_store %arg8[%c0_17, %c0_18], %22 {strides = array<i32>} : memref<1x8xf32, #tpu.memory_space<vmem>>, vector<1x8xf32>,
    return
  }
  func.func @transform_0(%arg0: i32) -> (i32, i32) {
    %c0_i32 = arith.constant 0 : i32
    %c0_i32_0 = arith.constant 0 : i32
    return %arg0, %c0_i32 : i32, i32
  }
  func.func @transform_1(%arg0: i32) -> (i32, i32) {
    %c0_i32 = arith.constant 0 : i32
    %c0_i32_0 = arith.constant 0 : i32
    %c0_i32_1 = arith.constant 0 : i32
    return %c0_i32, %c0_i32_0 : i32, i32
  }
  func.func @transform_2(%arg0: i32) -> (i32, i32) {
    %c0_i32 = arith.constant 0 : i32
    %c0_i32_0 = arith.constant 0 : i32
    %c0_i32_1 = arith.constant 0 : i32
    return %c0_i32, %c0_i32_0 : i32, i32
  }
  func.func @transform_3(%arg0: i32) -> (i32, i32) {
    %c0_i32 = arith.constant 0 : i32
    %c0_i32_0 = arith.constant 0 : i32
    %c0_i32_1 = arith.constant 0 : i32
    return %c0_i32, %c0_i32_0 : i32, i32
  }
  func.func @transform_4(%arg0: i32) -> (i32, i32) {
    %c0_i32 = arith.constant 0 : i32
    %c0_i32_0 = arith.constant 0 : i32
    %c0_i32_1 = arith.constant 0 : i32
    return %c0_i32, %c0_i32_0 : i32, i32
  }
  func.func @transform_5(%arg0: i32) -> (i32, i32) {
    %c0_i32 = arith.constant 0 : i32
    %c0_i32_0 = arith.constant 0 : i32
    %c0_i32_1 = arith.constant 0 : i32
    return %c0_i32, %c0_i32_0 : i32, i32
  }
  func.func @transform_6(%arg0: i32) -> (i32, i32) {
    %c0_i32 = arith.constant 0 : i32
    %c0_i32_0 = arith.constant 0 : i32
    %c0_i32_1 = arith.constant 0 : i32
    return %c0_i32, %c0_i32_0 : i32, i32
  }
  func.func @transform_7(%arg0: i32) -> (i32, i32) {
    %c0_i32 = arith.constant 0 : i32
    %c0_i32_0 = arith.constant 0 : i32
    return %c0_i32, %arg0 : i32, i32
  }
}

</mosaic_0001>

<llo_original>
// kernel: tpu_custom_call.1
$region0: #{tpu_custom_call.1}
  #allocation0 [shape = 'u32[]', space=smem, size = 0x4, offset = 0x4, fixed_abs, tag = 'smem constant byte address 0x4 - core index']
  #allocation1 [shape = 'u32[144,128]{1,0:T(1,128)}', space=vmem, size = 0x12000, scoped, tag = 'internal scratch']
  #allocation2 [shape = 'f32[1,1]{1,0:T(1,128)S(1)}', space=vmem, size = 0x200, scoped, tag = 'scoped memory for tpu_custom_call.1']
  %s0 = inlined_call_operand.vmem [shape: f32[8,16], index: 0, kind: input, shape index: {}]
  %s1 = inlined_call_operand.vmem [shape: f32[32,16], index: 1, kind: input, shape index: {}]
  %s2 = inlined_call_operand.vmem [shape: f32[32,1], index: 2, kind: input, shape index: {}]
  %s3 = inlined_call_operand.vmem [shape: f32[32,32], index: 3, kind: input, shape index: {}]
  %s4 = inlined_call_operand.vmem [shape: f32[32,1], index: 4, kind: input, shape index: {}]
  %s5 = inlined_call_operand.vmem [shape: f32[32,1], index: 5, kind: input, shape index: {}]
  %s6 = inlined_call_operand.<no memory space> [shape: f32[1,1], index: 6, kind: input, shape index: {}]
  %s7 = inlined_call_operand.hbm [shape: f32[1,8], index: 7, kind: output, shape index: {}]
  %s8 = sld [smem:[#allocation0]]
  $region38: #{tpu_custom_call.1} parent=0
    _
  %s10 = ssub.s32 1, %s8
  %s11 = scalar_select 0, %s10, %s8
  %v12 = vstv %s6
  %13 = vst [vmem:[#allocation2] sm:$0x1] %v12
  $region1: #{tpu_custom_call.1} parent=0
    #allocation3 [shape = 'u8[512]{0}', space=vmem, size = 0x400, scoped, tag = 'output window, operand 0, single buffered']
    #allocation4 [shape = 's32[1]{0}', space=sflag, size = 0x4, scoped, tag = 'scoped memory for tpu_custom_call.1']
    %14 = vsyncpa [#allocation4], 0
    // Predicated region
    $region2: #{tpu_custom_call.1} parent=1 // pred_check
      _
    $region3: #{tpu_custom_call.1} parent=1 // pred_check_branch
      %16 = sbr.rel (0) target = $region5
    $region4: #{tpu_custom_call.1} parent=1 // pred_region
      _
    $region5: #{tpu_custom_call.1} parent=1 // pred_fallthru
      _
    // Predicated region
    $region6: #{tpu_custom_call.1} parent=1 // pred_check
      _
    $region7: #{tpu_custom_call.1} parent=1 // pred_check_branch
      %18 = sbr.rel (0) target = $region9
    $region8: #{tpu_custom_call.1} parent=1 // pred_region
      _
    $region9: #{tpu_custom_call.1} parent=1 // pred_fallthru
      _
    // Predicated region
    $region10: #{tpu_custom_call.1} parent=1 // pred_check
      _
    $region11: #{tpu_custom_call.1} parent=1 // pred_check_branch
      %20 = sbr.rel (0) target = $region13
    $region12: #{tpu_custom_call.1} parent=1 // pred_region
      _
    $region13: #{tpu_custom_call.1} parent=1 // pred_fallthru
      _
    // Predicated region
    $region14: #{tpu_custom_call.1} parent=1 // pred_check
      _
    $region15: #{tpu_custom_call.1} parent=1 // pred_check_branch
      %22 = sbr.rel (0) target = $region17
    $region16: #{tpu_custom_call.1} parent=1 // pred_region
      _
    $region17: #{tpu_custom_call.1} parent=1 // pred_fallthru
      _
    // Predicated region
    $region18: #{tpu_custom_call.1} parent=1 // pred_check
      _
    $region19: #{tpu_custom_call.1} parent=1 // pred_check_branch
      %24 = sbr.rel (0) target = $region21
    $region20: #{tpu_custom_call.1} parent=1 // pred_region
      _
    $region21: #{tpu_custom_call.1} parent=1 // pred_fallthru
      _
    // Predicated region
    $region22: #{tpu_custom_call.1} parent=1 // pred_check
      _
    $region23: #{tpu_custom_call.1} parent=1 // pred_check_branch
      %26 = sbr.rel (0) target = $region25
    $region24: #{tpu_custom_call.1} parent=1 // pred_region
      _
    $region25: #{tpu_custom_call.1} parent=1 // pred_fallthru
      _
    // Predicated region
    $region26: #{tpu_custom_call.1} parent=1 // pred_check
      _
    $region27: #{tpu_custom_call.1} parent=1 // pred_check_branch
      %28 = sbr.rel (0) target = $region29
    $region28: #{tpu_custom_call.1} parent=1 // pred_region
      _
    $region29: #{tpu_custom_call.1} parent=1 // pred_fallthru
      _
    %v29 = vld [vmem:[%s0] sm:$0xff]
    %v30 = vld [vmem:[%s1] sm:$0xff]
    %v31 = vld [vmem:[%s1 + $0x8] sm:$0xff]
    %v32 = vld [vmem:[%s1 + $0x10] sm:$0xff]
    %v33 = vld [vmem:[%s1 + $0x18] sm:$0xff]
    %v34 = vld [vmem:[%s2] sm:$0xff]
    %v35 = vld [vmem:[%s2 + $0x8] sm:$0xff]
    %v36 = vld [vmem:[%s2 + $0x10] sm:$0xff]
    %v37 = vld [vmem:[%s2 + $0x18] sm:$0xff]
    %39 = vset.pattern.permute.xlu0 0
    %40 = vperm.xlu0 %39, %v34
    %v41 = vpop.permute.xlu0 %40
    %44 = vset.pattern.permute.xlu0 0
    %45 = vperm.xlu0 %44, %v35
    %v46 = vpop.permute.xlu0 %45
    %49 = vset.pattern.permute.xlu0 0
    %50 = vperm.xlu0 %49, %v36
    %v51 = vpop.permute.xlu0 %50
    %54 = vset.pattern.permute.xlu0 0
    %55 = vperm.xlu0 %54, %v37
    %v56 = vpop.permute.xlu0 %55
    %vm58 = vcmask 130048
    %v60 = vsel %vm58, %v30, 0
    %v63 = vsel %vm58, %v31, 0
    %v66 = vsel %vm58, %v32, 0
    %v69 = vsel %vm58, %v33, 0
    %v72 = vsel %vm58, %v29, 0
    %74 = vmatprep.subr.mxu0 0.0
    %75 = vmatpush1.xpose.msra.mxu0 0.0
    %76 = vmatprep.subr.mxu0 0.0
    %77 = vmatpush1.xpose.msra.mxu0 0.0
    %78 = vmatprep.subr.mxu0 0.0
    %79 = vmatpush1.xpose.msra.mxu0 0.0
    %80 = vmatprep.subr.mxu0 0.0
    %81 = vmatpush1.xpose.msra.mxu0 0.0
    %82 = vmatprep.subr.mxu0 0.0
    %83 = vmatpush1.xpose.msra.mxu0 0.0
    %84 = vmatprep.subr.mxu0 0.0
    %85 = vmatpush1.xpose.msra.mxu0 0.0
    %86 = vmatprep.subr.mxu0 0.0
    %87 = vmatpush1.xpose.msra.mxu0 0.0
    %88 = vmatprep.subr.mxu0 0.0
    %89 = vmatpush1.xpose.msra.mxu0 0.0
    %90 = vmatprep.subr.mxu0 0.0
    %91 = vmatpush1.xpose.msra.mxu0 0.0
    %92 = vmatprep.subr.mxu0 0.0
    %93 = vmatpush1.xpose.msra.mxu0 0.0
    %94 = vmatprep.subr.mxu0 0.0
    %95 = vmatpush1.xpose.msra.mxu0 0.0
    %96 = vmatprep.subr.mxu0 0.0
    %97 = vmatpush1.xpose.msra.mxu0 0.0
    %98 = vmatprep.subr.mxu0 0.0
    %99 = vmatpush1.xpose.msra.mxu0 0.0
    %100 = vmatprep.subr.mxu0 0.0
    %101 = vmatpush1.xpose.msra.mxu0 0.0
    %102 = vmatprep.subr.mxu0 0.0
    %103 = vmatpush1.xpose.msra.mxu0 0.0
    %104 = vmatprep.subr.mxu0 0.0
    %105 = vmatpush1.xpose.msra.mxu0 %v72
    %106 = vmatprep.subr.mxu0 0.0
    %107 = vmatpush2.xpose.msra.mxu0 0.0
    %108 = vmatprep.subr.mxu0 0.0
    %109 = vmatpush2.xpose.msra.mxu0 0.0
    %110 = vmatprep.subr.mxu0 0.0
    %111 = vmatpush2.xpose.msra.mxu0 0.0
    %112 = vmatprep.subr.mxu0 0.0
    %113 = vmatpush2.xpose.msra.mxu0 0.0
    %114 = vmatprep.subr.mxu0 0.0
    %115 = vmatpush2.xpose.msra.mxu0 0.0
    %116 = vmatprep.subr.mxu0 0.0
    %117 = vmatpush2.xpose.msra.mxu0 0.0
    %118 = vmatprep.subr.mxu0 0.0
    %119 = vmatpush2.xpose.msra.mxu0 0.0
    %120 = vmatprep.subr.mxu0 0.0
    %121 = vmatpush2.xpose.msra.mxu0 0.0
    %122 = vmatprep.subr.mxu0 0.0
    %123 = vmatpush2.xpose.msra.mxu0 0.0
    %124 = vmatprep.subr.mxu0 0.0
    %125 = vmatpush2.xpose.msra.mxu0 0.0
    %126 = vmatprep.subr.mxu0 0.0
    %127 = vmatpush2.xpose.msra.mxu0 0.0
    %128 = vmatprep.subr.mxu0 0.0
    %129 = vmatpush2.xpose.msra.mxu0 0.0
    %130 = vmatprep.subr.mxu0 0.0
    %131 = vmatpush2.xpose.msra.mxu0 0.0
    %132 = vmatprep.subr.mxu0 0.0
    %133 = vmatpush2.xpose.msra.mxu0 0.0
    %134 = vmatprep.subr.mxu0 0.0
    %135 = vmatpush2.xpose.msra.mxu0 0.0
    %136 = vmatprep.subr.mxu0 0.0
    %137 = vmatpush2.xpose.msra.mxu0 0.0
    %138 = vmatprep.mubr.f32.mxu0 0.0
    %139 = vmatmul.mubr.f32.gmra.mxu0 %v60
    %v140 = vpop.f32.mrf.mxu0
    %v141 = vadd.f32 %v41, %v140
    %v142 = vpop.f32.mrf.mxu0
    %143 = vmatprep.mubr.f32.mxu0 0.0
    %144 = vmatmul.mubr.f32.gmra.mxu0 %v63
    %v145 = vpop.f32.mrf.mxu0
    %v146 = vadd.f32 %v46, %v145
    %v147 = vpop.f32.mrf.mxu0
    %148 = vmatprep.mubr.f32.mxu0 0.0
    %149 = vmatmul.mubr.f32.gmra.mxu0 %v66
    %v150 = vpop.f32.mrf.mxu0
    %v151 = vadd.f32 %v51, %v150
    %v152 = vpop.f32.mrf.mxu0
    %153 = vmatprep.mubr.f32.mxu0 0.0
    %154 = vmatmul.mubr.f32.gmra.mxu0 %v69
    %v155 = vpop.f32.mrf.mxu0
    %v156 = vadd.f32 %v56, %v155
    %v157 = vpop.f32.mrf.mxu0
    %158 = vdwg.mxu0
    %v159 = vmax.f32 %v141, 0.0
    %v160 = vmax.f32 %v146, 0.0
    %v161 = vmax.f32 %v151, 0.0
    %v162 = vmax.f32 %v156, 0.0
    %v163 = vld [vmem:[%s3] sm:$0xff]
    %v164 = vld [vmem:[%s3 + $0x8] sm:$0xff]
    %v165 = vld [vmem:[%s3 + $0x10] sm:$0xff]
    %v166 = vld [vmem:[%s3 + $0x18] sm:$0xff]
    %v167 = vld [vmem:[%s4] sm:$0xff]
    %v168 = vld [vmem:[%s4 + $0x8] sm:$0xff]
    %v169 = vld [vmem:[%s4 + $0x10] sm:$0xff]
    %v170 = vld [vmem:[%s4 + $0x18] sm:$0xff]
    %172 = vset.pattern.permute.xlu0 0
    %173 = vperm.xlu0 %172, %v167
    %v174 = vpop.permute.xlu0 %173
    %177 = vset.pattern.permute.xlu0 0
    %178 = vperm.xlu0 %177, %v168
    %v179 = vpop.permute.xlu0 %178
    %182 = vset.pattern.permute.xlu0 0
    %183 = vperm.xlu0 %182, %v169
    %v184 = vpop.permute.xlu0 %183
    %187 = vset.pattern.permute.xlu0 0
    %188 = vperm.xlu0 %187, %v170
    %v189 = vpop.permute.xlu0 %188
    %vm191 = vcmask 261120
    %v193 = vsel %vm191, %v163, 0
    %v196 = vsel %vm191, %v164, 0
    %v199 = vsel %vm191, %v165, 0
    %v202 = vsel %vm191, %v166, 0
    %204 = vmatprep.subr.mxu0 0.0
    %205 = vmatpush1.msra.mxu0 0.0
    %206 = vmatprep.subr.mxu0 0.0
    %207 = vmatpush1.msra.mxu0 0.0
    %208 = vmatprep.subr.mxu0 0.0
    %209 = vmatpush1.msra.mxu0 0.0
    %210 = vmatprep.subr.mxu0 0.0
    %211 = vmatpush1.msra.mxu0 0.0
    %212 = vmatprep.subr.mxu0 0.0
    %213 = vmatpush1.msra.mxu0 0.0
    %214 = vmatprep.subr.mxu0 0.0
    %215 = vmatpush1.msra.mxu0 0.0
    %216 = vmatprep.subr.mxu0 0.0
    %217 = vmatpush1.msra.mxu0 0.0
    %218 = vmatprep.subr.mxu0 0.0
    %219 = vmatpush1.msra.mxu0 0.0
    %220 = vmatprep.subr.mxu0 0.0
    %221 = vmatpush1.msra.mxu0 0.0
    %222 = vmatprep.subr.mxu0 0.0
    %223 = vmatpush1.msra.mxu0 0.0
    %224 = vmatprep.subr.mxu0 0.0
    %225 = vmatpush1.msra.mxu0 0.0
    %226 = vmatprep.subr.mxu0 0.0
    %227 = vmatpush1.msra.mxu0 0.0
    %228 = vmatprep.subr.mxu0 0.0
    %229 = vmatpush1.msra.mxu0 %v162
    %230 = vmatprep.subr.mxu0 0.0
    %231 = vmatpush1.msra.mxu0 %v161
    %232 = vmatprep.subr.mxu0 0.0
    %233 = vmatpush1.msra.mxu0 %v160
    %234 = vmatprep.subr.mxu0 0.0
    %235 = vmatpush1.msra.mxu0 %v159
    %236 = vmatprep.subr.mxu0 0.0
    %237 = vmatpush2.msra.mxu0 0.0
    %238 = vmatprep.subr.mxu0 0.0
    %239 = vmatpush2.msra.mxu0 0.0
    %240 = vmatprep.subr.mxu0 0.0
    %241 = vmatpush2.msra.mxu0 0.0
    %242 = vmatprep.subr.mxu0 0.0
    %243 = vmatpush2.msra.mxu0 0.0
    %244 = vmatprep.subr.mxu0 0.0
    %245 = vmatpush2.msra.mxu0 0.0
    %246 = vmatprep.subr.mxu0 0.0
    %247 = vmatpush2.msra.mxu0 0.0
    %248 = vmatprep.subr.mxu0 0.0
    %249 = vmatpush2.msra.mxu0 0.0
    %250 = vmatprep.subr.mxu0 0.0
    %251 = vmatpush2.msra.mxu0 0.0
    %252 = vmatprep.subr.mxu0 0.0
    %253 = vmatpush2.msra.mxu0 0.0
    %254 = vmatprep.subr.mxu0 0.0
    %255 = vmatpush2.msra.mxu0 0.0
    %256 = vmatprep.subr.mxu0 0.0
    %257 = vmatpush2.msra.mxu0 0.0
    %258 = vmatprep.subr.mxu0 0.0
    %259 = vmatpush2.msra.mxu0 0.0
    %260 = vmatprep.subr.mxu0 0.0
    %261 = vmatpush2.msra.mxu0 0.0
    %262 = vmatprep.subr.mxu0 0.0
    %263 = vmatpush2.msra.mxu0 0.0
    %264 = vmatprep.subr.mxu0 0.0
    %265 = vmatpush2.msra.mxu0 0.0
    %266 = vmatprep.subr.mxu0 0.0
    %267 = vmatpush2.msra.mxu0 0.0
    %268 = vmatprep.mubr.f32.mxu0 0.0
    %269 = vmatmul.mubr.f32.gmra.mxu0 %v193
    %v270 = vpop.f32.mrf.mxu0
    %v271 = vadd.f32 %v174, %v270
    %v272 = vpop.f32.mrf.mxu0
    %273 = vmatprep.mubr.f32.mxu0 0.0
    %274 = vmatmul.mubr.f32.gmra.mxu0 %v196
    %v275 = vpop.f32.mrf.mxu0
    %v276 = vadd.f32 %v179, %v275
    %v277 = vpop.f32.mrf.mxu0
    %278 = vmatprep.mubr.f32.mxu0 0.0
    %279 = vmatmul.mubr.f32.gmra.mxu0 %v199
    %v280 = vpop.f32.mrf.mxu0
    %v281 = vadd.f32 %v184, %v280
    %v282 = vpop.f32.mrf.mxu0
    %283 = vmatprep.mubr.f32.mxu0 0.0
    %284 = vmatmul.mubr.f32.gmra.mxu0 %v202
    %v285 = vpop.f32.mrf.mxu0
    %v286 = vadd.f32 %v189, %v285
    %v287 = vpop.f32.mrf.mxu0
    %288 = vdwg.mxu0
    %v289 = vmax.f32 %v271, 0.0
    %v290 = vmax.f32 %v276, 0.0
    %v291 = vmax.f32 %v281, 0.0
    %v292 = vmax.f32 %v286, 0.0
    %v293 = vld [vmem:[%s5] sm:$0xff]
    %v294 = vld [vmem:[%s5 + $0x8] sm:$0xff]
    %v295 = vld [vmem:[%s5 + $0x10] sm:$0xff]
    %v296 = vld [vmem:[%s5 + $0x18] sm:$0xff]
    %298 = vset.pattern.permute.xlu0 0
    %299 = vperm.xlu0 %298, %v293
    %v300 = vpop.permute.xlu0 %299
    %303 = vset.pattern.permute.xlu0 0
    %304 = vperm.xlu0 %303, %v294
    %v305 = vpop.permute.xlu0 %304
    %308 = vset.pattern.permute.xlu0 0
    %309 = vperm.xlu0 %308, %v295
    %v310 = vpop.permute.xlu0 %309
    %313 = vset.pattern.permute.xlu0 0
    %314 = vperm.xlu0 %313, %v296
    %v315 = vpop.permute.xlu0 %314
    %v317 = vmul.f32 %v289, %v300
    %v318 = vmul.f32 %v290, %v305
    %v319 = vmul.f32 %v291, %v310
    %v320 = vmul.f32 %v292, %v315
    %vm321 = vcmask 64512
    %v322 = vsel %vm321, %v317, 0.0
    %v323 = vsel %vm321, %v318, 0.0
    %v324 = vadd.f32 %v322, %v323
    %v325 = vsel %vm321, %v319, 0.0
    %v326 = vadd.f32 %v324, %v325
    %v327 = vsel %vm321, %v320, 0.0
    %v328 = vadd.f32 %v326, %v327
    %v329 = vrot.slane %v328, 4
    %v330 = vadd.f32 %v328, %v329
    %v331 = vrot.slane %v330, 2
    %v332 = vadd.f32 %v330, %v331
    %v333 = vrot.slane %v332, 1
    %v334 = vadd.f32 %v332, %v333
    %v335 = vld [vmem:[#allocation2] sm:$0x1]
    %337 = vset.pattern.permute.xlu0 0
    %338 = vperm.xlu0 %337, %v335
    %v339 = vpop.permute.xlu0 %338
    %v341 = vlaneseq
    %v342 = vshrl.u32 %v341, 7
    %v343 = vsub.s32 0, %v342
    %v344 = vrot.slane %v339, %v343
    %v345 = vadd.f32 %v334, %v344
    %vm346 = vcmask 57344
    %347 = vst.msk [vmem:[#allocation3] sm:$0x1] %vm346, %v345
    // Predicated region
    $region30: #{tpu_custom_call.1} parent=1 // pred_check
      _
    $region31: #{tpu_custom_call.1} parent=1 // pred_check_branch
      %349 = sbr.rel (0) target = $region33
    $region32: #{tpu_custom_call.1} parent=1 // pred_region
      %s351 = ssub.s32 16, 16
      %352 = vsyncadd [#allocation4], %s351
      %s354 = sshll.u32 [#allocation3], 4
      %s355 = int_to_ptr.vmem [resolvable:$true] %s354
      %357 = dma.vmem_to_hbm [thread:$0]  %s355, 16, %s7, [#allocation4]
    $region33: #{tpu_custom_call.1} parent=1 // pred_fallthru
      _
    // Predicated region
    $region34: #{tpu_custom_call.1} parent=1 // pred_check
      _
    $region35: #{tpu_custom_call.1} parent=1 // pred_check_branch
      %359 = sbr.rel (0) target = $region37
    $region36: #{tpu_custom_call.1} parent=1 // pred_region
      %360 = dma.done [#allocation4], 16
    $region37: #{tpu_custom_call.1} parent=1 // pred_fallthru
      _
    %361 = vsyncpa [#allocation4], 1

</llo_original>
